<compile_context>
chip_gen: v5e
topology: v5e:2x2
jax: 0.10.0
libtpu: 0.0.40
codegen_flags: <defaults>
</compile_context>

<pallas_src>
import functools

import jax
import jax.numpy as jnp
from jax.experimental import pallas as pl
from jax.experimental.pallas import tpu as pltpu

_EPS = 1e-12           # F.normalize default eps (f32)
_EPS_SQ = _EPS * _EPS  # clamp on sum-of-squares == max(||v||, eps) on the norm

# Minimum sublane multiple per operand itemsize (f32 -> 8, bf16 -> 16, 8b -> 32)
_SUBLANE = {4: 8, 2: 16, 1: 32}


def _round_up(v, m):
    return (v + m - 1) // m * m


def _vmem_limit_bytes():
    """~75% of per-core VMEM (v5e/v6e: 128 MiB, v7x: 64 MiB) as headroom-safe limit."""
    try:
        cap = int(pltpu.get_tpu_info().vmem_capacity_bytes)
    except Exception:
        cap = 64 * 1024 * 1024  # conservative fallback (v7x per-core VMEM)
    return (cap * 3) // 4


def _normed_linear_kernel(x_ref, w_ref, inv_row_ref, inv_col_ref, o_ref, *,
                          single_k):
    """out[i,j] = sum_k x[i,k] w[k,j] * inv_row[i] * inv_col[j] (f32 accumulate)."""
    if single_k:
        # K fits in one block: no accumulator revisit, no init/finalize whens.
        acc = jnp.dot(x_ref[...], w_ref[...], preferred_element_type=jnp.float32)
        o_ref[...] = (acc * inv_row_ref[...] * inv_col_ref[...]).astype(o_ref.dtype)
        return

    k_step = pl.program_id(2)

    @pl.when(k_step == 0)
    def _():
        o_ref[...] = jnp.zeros_like(o_ref)

    # Output block is VMEM-resident across K (index_map ignores kk) -> it IS
    # the f32 accumulator; no separate scratch tile needed.
    o_ref[...] += jnp.dot(x_ref[...], w_ref[...],
                          preferred_element_type=jnp.float32)

    @pl.when(k_step == pl.num_programs(2) - 1)
    def _():
        o_ref[...] = (o_ref[...] * inv_row_ref[...]
                      * inv_col_ref[...]).astype(o_ref.dtype)


@functools.partial(jax.jit, static_argnames=("tm", "tn", "tk", "matmul_dtype"))
def normed_linear(x, weight, *, tm=512, tn=1024, tk=None,
                  matmul_dtype=jnp.bfloat16):
    """out = F.normalize(x, dim=1) @ F.normalize(weight, dim=0)."""
    n, k = x.shape
    k2, m = weight.shape
    assert k == k2, (k, k2)

    mx_dtype = jnp.dtype(matmul_dtype) if matmul_dtype is not None else jnp.dtype(x.dtype)
    sub = _SUBLANE.get(mx_dtype.itemsize, 8)

    # Exact f32 inverse norms, computed once outside the kernel (tiny vectors).
    xf = x.astype(jnp.float32)
    wf = weight.astype(jnp.float32)
    inv_row = jax.lax.rsqrt(
        jnp.maximum(jnp.sum(xf * xf, axis=1, keepdims=True), _EPS_SQ))   # (n, 1)
    inv_col = jax.lax.rsqrt(
        jnp.maximum(jnp.sum(wf * wf, axis=0, keepdims=True), _EPS_SQ))   # (1, m)

    # ---- tile selection -----------------------------------------------------
    tm = _round_up(min(tm, _round_up(n, sub)), sub)
    tn = _round_up(min(tn, _round_up(m, 128)), 128)
    k_full = _round_up(k, 128)

    vmem_limit = _vmem_limit_bytes()

    def _tile_bytes(tk_):
        # double-buffered x/w/out tiles + scale vectors
        return (2 * tm * tk_ * mx_dtype.itemsize
                + 2 * tk_ * tn * mx_dtype.itemsize
                + 2 * tm * tn * 4
                + 2 * (tm + tn) * 4)

    if tk is None:
        # Collapse the K grid axis when a full-K tile fits the VMEM budget
        # (typical for a classifier head); otherwise fall back to 1024.
        tk = k_full if _tile_bytes(k_full) <= (vmem_limit * 3) // 5 else 1024
    tk = _round_up(min(tk, k_full), 128)

    n_p = _round_up(n, tm)
    m_p = _round_up(m, tn)
    k_p = _round_up(k, tk)

    # v7x megacore: make sure one "parallel" axis has extent >= 2 when possible
    # (prefer splitting M; N of a classifier head is often a single tile).
    if n_p // tm == 1 and m_p // tn == 1 and n_p % (2 * sub) == 0:
        tm = n_p // 2

    grid = (n_p // tm, m_p // tn, k_p // tk)
    single_k = grid[2] == 1

    # ---- pad operands (zero K-padding is exact; M/N padding is sliced off) --
    x_p = x.astype(mx_dtype)
    w_p = weight.astype(mx_dtype)
    if (n_p, k_p) != (n, k):
        x_p = jnp.pad(x_p, ((0, n_p - n), (0, k_p - k)))
    if (k_p, m_p) != (k, m):
        w_p = jnp.pad(w_p, ((0, k_p - k), (0, m_p - m)))
    inv_row_p = inv_row if n_p == n else jnp.pad(
        inv_row, ((0, n_p - n), (0, 0)), constant_values=1.0)
    inv_col_p = inv_col if m_p == m else jnp.pad(
        inv_col, ((0, 0), (0, m_p - m)), constant_values=1.0)

    kernel = functools.partial(_normed_linear_kernel, single_k=single_k)

    out_p = pl.pallas_call(
        kernel,
        out_shape=jax.ShapeDtypeStruct((n_p, m_p), jnp.float32),
        grid_spec=pltpu.PrefetchScalarGridSpec(
            num_scalar_prefetch=0,
            grid=grid,
            in_specs=[
                pl.BlockSpec((tm, tk), lambda i, j, kk: (i, kk)),   # x
                pl.BlockSpec((tk, tn), lambda i, j, kk: (kk, j)),   # w
                pl.BlockSpec((tm, 1), lambda i, j, kk: (i, 0)),     # inv_row
                pl.BlockSpec((1, tn), lambda i, j, kk: (0, j)),     # inv_col
            ],
            out_specs=pl.BlockSpec((tm, tn), lambda i, j, kk: (i, j)),
        ),
        compiler_params=pltpu.CompilerParams(
            # K is the reduction (innermost, "arbitrary"); M/N shard across TCs.
            dimension_semantics=("parallel", "parallel", "arbitrary"),
            vmem_limit_bytes=vmem_limit,
        ),
        cost_estimate=pl.CostEstimate(
            flops=2 * n_p * m_p * k_p + 2 * n_p * m_p,
            transcendentals=0,
            bytes_accessed=(n_p * k_p * mx_dtype.itemsize * grid[1]
                            + k_p * m_p * mx_dtype.itemsize * grid[0]
                            + n_p * m_p * 4),
        ),
    )(x_p, w_p, inv_row_p, inv_col_p)

    return out_p[:n, :m]


def init_normed_linear_weight(key, in_features, out_features):
    # Mirrors: Tensor(in, out).uniform_(-1, 1).renorm_(2, 1, 1e-5).mul_(1e5)
    # renorm over dim=1 clamps each column's L2 norm to <= 1e-5; then *1e5.
    w = jax.random.uniform(key, (in_features, out_features),
                           dtype=jnp.float32, minval=-1.0, maxval=1.0)
    col_norm = jnp.sqrt(jnp.sum(w * w, axis=0, keepdims=True))
    scale = jnp.where(col_norm > 1e-5, 1e-5 / (col_norm + 1e-7), 1.0)
    return w * scale * 1e5


def reference_normed_linear(x, weight):
    xn = x / jnp.maximum(jnp.linalg.norm(x, axis=1, keepdims=True), _EPS)
    wn = weight / jnp.maximum(jnp.linalg.norm(weight, axis=0, keepdims=True), _EPS)
    return xn @ wn


if __name__ == "__main__":
    key = jax.random.PRNGKey(0)
    kx, kw, kx2, kw2, kx3, kw3 = jax.random.split(key, 6)

    # 1) Classifier-head sized problem, default bf16-MXU path, single-K grid.
    N, IN_F, OUT_F = 8, 32, 16
    x = jax.random.normal(kx, (N, IN_F), dtype=jnp.float32)
    w = init_normed_linear_weight(kw, IN_F, OUT_F)
    out = jax.block_until_ready(normed_linear(x, w))
    ref = reference_normed_linear(x, w)
    assert out.shape == (N, OUT_F)
    assert jnp.allclose(out, ref, atol=2e-2, rtol=2e-2), \
        float(jnp.max(jnp.abs(out - ref)))

    # 2) Padded multi-tile grid with a K split, exact f32 MXU path.
    N2, IN2, OUT2 = 40, 320, 272
    x2 = jax.random.normal(kx2, (N2, IN2), dtype=jnp.float32)
    w2 = init_normed_linear_weight(kw2, IN2, OUT2)
    out2 = jax.block_until_ready(
        normed_linear(x2, w2, tm=16, tn=128, tk=128, matmul_dtype=jnp.float32))
    ref2 = reference_normed_linear(x2, w2)
    assert out2.shape == (N2, OUT2)
    assert jnp.allclose(out2, ref2, atol=1e-5, rtol=1e-5), \
        float(jnp.max(jnp.abs(out2 - ref2)))

    # 3) bf16 MXU path with a K split (multi-K kernel in its default dtype).
    N3, IN3, OUT3 = 64, 512, 256
    x3 = jax.random.normal(kx3, (N3, IN3), dtype=jnp.float32)
    w3 = init_normed_linear_weight(kw3, IN3, OUT3)
    out3 = jax.block_until_ready(normed_linear(x3, w3, tm=32, tn=128, tk=128))
    ref3 = reference_normed_linear(x3, w3)
    assert out3.shape == (N3, OUT3)
    assert jnp.allclose(out3, ref3, atol=2e-2, rtol=2e-2), \
        float(jnp.max(jnp.abs(out3 - ref3)))

    print("KERNEL_OK")
</pallas_src>

<mosaic_0001>
module attributes {stable_mosaic.version = 11 : i64} {
  func.func @_normed_linear_kernel(%arg0: i32, %arg1: i32, %arg2: i32, %arg3: memref<16x128xbf16, #tpu.memory_space<vmem>>, %arg4: memref<128x128xbf16, #tpu.memory_space<vmem>>, %arg5: memref<16x1xf32, #tpu.memory_space<vmem>>, %arg6: memref<1x128xf32, #tpu.memory_space<vmem>>, %arg7: memref<16x128xf32, #tpu.memory_space<vmem>>) attributes {dimension_semantics = [#tpu.dimension_semantics<parallel>, #tpu.dimension_semantics<parallel>, #tpu.dimension_semantics<arbitrary>], iteration_bounds = array<i64: 1, 1, 1>, scalar_prefetch = 0 : i64, scratch_operands = 0 : i64, tpu.core_type = #tpu.core_type<tc>, window_params = [{transform_indices = @transform_0, window_bounds = array<i64: 16, 128>}, {transform_indices = @transform_1, window_bounds = array<i64: 128, 128>}, {transform_indices = @transform_2, window_bounds = array<i64: 16, 1>}, {transform_indices = @transform_3, window_bounds = array<i64: 1, 128>}, {transform_indices = @transform_4, window_bounds = array<i64: 16, 128>}]} {
    %c0 = arith.constant 0 : index
    %c0_0 = arith.constant 0 : index
    %0 = vector.load %arg3[%c0, %c0_0] : memref<16x128xbf16, #tpu.memory_space<vmem>>, vector<16x128xbf16>
    %c0_1 = arith.constant 0 : index
    %c0_2 = arith.constant 0 : index
    %1 = vector.load %arg4[%c0_1, %c0_2] : memref<128x128xbf16, #tpu.memory_space<vmem>>, vector<128x128xbf16>
    %cst = arith.constant dense<0.000000e+00> : vector<16x128xf32>
    %2 = tpu.matmul %0, %1, %cst {dimension_numbers = #tpu.dot_dimension_numbers<[1], [0], [0], [1], [0, 0, 1, 1], [], []>} : vector<16x128xbf16>, vector<128x128xbf16>, vector<16x128xf32> -> vector<16x128xf32>
    %c0_3 = arith.constant 0 : index
    %c0_4 = arith.constant 0 : index
    %3 = vector.load %arg5[%c0_3, %c0_4] : memref<16x1xf32, #tpu.memory_space<vmem>>, vector<16x1xf32>
    %4 = vector.broadcast %3 : vector<16x1xf32> to vector<16x128xf32>
    %5 = arith.mulf %2, %4 : vector<16x128xf32>
    %c0_5 = arith.constant 0 : index
    %c0_6 = arith.constant 0 : index
    %6 = vector.load %arg6[%c0_5, %c0_6] : memref<1x128xf32, #tpu.memory_space<vmem>>, vector<1x128xf32>
    %7 = vector.broadcast %6 : vector<1x128xf32> to vector<16x128xf32>
    %8 = arith.mulf %5, %7 : vector<16x128xf32>
    %c0_7 = arith.constant 0 : index
    %c0_8 = arith.constant 0 : index
    %9 = vector.load %arg7[%c0_7, %c0_8] : memref<16x128xf32, #tpu.memory_space<vmem>>, vector<16x128xf32>
    tpu.vector_store %arg7[%c0_7, %c0_8], %8 {strides = array<i32>} : memref<16x128xf32, #tpu.memory_space<vmem>>, vector<16x128xf32>,
    return
  }
  func.func @transform_0(%arg0: i32, %arg1: i32, %arg2: i32) -> (i32, i32) {
    %c0_i32 = arith.constant 0 : i32
    return %arg0, %arg2 : i32, i32
  }
  func.func @transform_1(%arg0: i32, %arg1: i32, %arg2: i32) -> (i32, i32) {
    %c0_i32 = arith.constant 0 : i32
    return %arg2, %arg1 : i32, i32
  }
  func.func @transform_2(%arg0: i32, %arg1: i32, %arg2: i32) -> (i32, i32) {
    %c0_i32 = arith.constant 0 : i32
    %c0_i32_0 = arith.constant 0 : i32
    return %arg0, %c0_i32 : i32, i32
  }
  func.func @transform_3(%arg0: i32, %arg1: i32, %arg2: i32) -> (i32, i32) {
    %c0_i32 = arith.constant 0 : i32
    %c0_i32_0 = arith.constant 0 : i32
    return %c0_i32, %arg1 : i32, i32
  }
  func.func @transform_4(%arg0: i32, %arg1: i32, %arg2: i32) -> (i32, i32) {
    %c0_i32 = arith.constant 0 : i32
    return %arg0, %arg1 : i32, i32
  }
}

</mosaic_0001>

<llo_original>
// kernel: normed_linear.1
$region0: #{normed_linear.1}
  #allocation0 [shape = 'u32[]', space=smem, size = 0x4, offset = 0x4, fixed_abs, tag = 'smem constant byte address 0x4 - core index']
  #allocation1 [shape = 'u32[72,128]{1,0:T(1,128)}', space=vmem, size = 0x9000, scoped, tag = 'internal scratch']
  %s0 = inlined_call_operand.vmem [shape: bf16[16,128], index: 0, kind: input, shape index: {}]
  %s1 = inlined_call_operand.vmem [shape: bf16[128,128], index: 1, kind: input, shape index: {}]
  %s2 = inlined_call_operand.vmem [shape: f32[16,1], index: 2, kind: input, shape index: {}]
  %s3 = inlined_call_operand.vmem [shape: f32[1,128], index: 3, kind: input, shape index: {}]
  %s4 = inlined_call_operand.vmem [shape: f32[16,128], index: 4, kind: output, shape index: {}]
  %s5 = sld [smem:[#allocation0]]
  $region26: #{normed_linear.1} parent=0
    _
  %s7 = ssub.s32 1, %s5
  %s8 = scalar_select 0, %s7, %s5
  // Predicated region
  $region2: #{normed_linear.1} parent=0 // pred_check
    _
  $region3: #{normed_linear.1} parent=0 // pred_check_branch
    %10 = sbr.rel (0) target = $region5
  $region4: #{normed_linear.1} parent=0 // pred_region
    _
  $region5: #{normed_linear.1} parent=0 // pred_fallthru
    _
  // Predicated region
  $region6: #{normed_linear.1} parent=0 // pred_check
    _
  $region7: #{normed_linear.1} parent=0 // pred_check_branch
    %12 = sbr.rel (0) target = $region9
  $region8: #{normed_linear.1} parent=0 // pred_region
    _
  $region9: #{normed_linear.1} parent=0 // pred_fallthru
    _
  // Predicated region
  $region10: #{normed_linear.1} parent=0 // pred_check
    _
  $region11: #{normed_linear.1} parent=0 // pred_check_branch
    %14 = sbr.rel (0) target = $region13
  $region12: #{normed_linear.1} parent=0 // pred_region
    _
  $region13: #{normed_linear.1} parent=0 // pred_fallthru
    _
  // Predicated region
  $region14: #{normed_linear.1} parent=0 // pred_check
    _
  $region15: #{normed_linear.1} parent=0 // pred_check_branch
    %16 = sbr.rel (0) target = $region17
  $region16: #{normed_linear.1} parent=0 // pred_region
    _
  $region17: #{normed_linear.1} parent=0 // pred_fallthru
    _
  %v17 = vld [vmem:[%s0] sm:$0xf]
  %v18 = vld [vmem:[%s0 + $0x4] sm:$0xf]
  %v19 = vld [vmem:[%s1] sm:$0xf]
  %v20 = vld [vmem:[%s1 + $0x4] sm:$0xf]
  %v21 = vld [vmem:[%s1 + $0x8] sm:$0xf]
  %v22 = vld [vmem:[%s1 + $0xc] sm:$0xf]
  %v23 = vld [vmem:[%s1 + $0x10] sm:$0xf]
  %v24 = vld [vmem:[%s1 + $0x14] sm:$0xf]
  %v25 = vld [vmem:[%s1 + $0x18] sm:$0xf]
  %v26 = vld [vmem:[%s1 + $0x1c] sm:$0xf]
  %v27 = vld [vmem:[%s1 + $0x20] sm:$0xf]
  %v28 = vld [vmem:[%s1 + $0x24] sm:$0xf]
  %v29 = vld [vmem:[%s1 + $0x28] sm:$0xf]
  %v30 = vld [vmem:[%s1 + $0x2c] sm:$0xf]
  %v31 = vld [vmem:[%s1 + $0x30] sm:$0xf]
  %v32 = vld [vmem:[%s1 + $0x34] sm:$0xf]
  %v33 = vld [vmem:[%s1 + $0x38] sm:$0xf]
  %v34 = vld [vmem:[%s1 + $0x3c] sm:$0xf]
  %v37 = vunpack.c.l.b16 %v17
  %v38 = vunpack.c.l.b16 %v18
  %v39 = vpack.c.b16 %v38, %v37
  %v57 = vunpack.c.l.b16 %v19
  %v58 = vunpack.c.l.b16 %v20
  %v59 = vunpack.c.l.b16 %v21
  %v60 = vunpack.c.l.b16 %v22
  %v61 = vunpack.c.l.b16 %v23
  %v62 = vunpack.c.l.b16 %v24
  %v63 = vunpack.c.l.b16 %v25
  %v64 = vunpack.c.l.b16 %v26
  %v65 = vunpack.c.l.b16 %v27
  %v66 = vunpack.c.l.b16 %v28
  %v67 = vunpack.c.l.b16 %v29
  %v68 = vunpack.c.l.b16 %v30
  %v69 = vunpack.c.l.b16 %v31
  %v70 = vunpack.c.l.b16 %v32
  %v71 = vunpack.c.l.b16 %v33
  %v72 = vunpack.c.l.b16 %v34
  %v73 = vpack.c.b16 %v58, %v57
  %v74 = vpack.c.b16 %v60, %v59
  %v75 = vpack.c.b16 %v62, %v61
  %v76 = vpack.c.b16 %v64, %v63
  %v77 = vpack.c.b16 %v66, %v65
  %v78 = vpack.c.b16 %v68, %v67
  %v79 = vpack.c.b16 %v70, %v69
  %v80 = vpack.c.b16 %v72, %v71
  %89 = vmatpush.bf16.msra.mxu0 %v80
  %90 = vmatpush.bf16.msra.mxu0 %v79
  %91 = vmatpush.bf16.msra.mxu0 %v78
  %92 = vmatpush.bf16.msra.mxu0 %v77
  %93 = vmatpush.bf16.msra.mxu0 %v76
  %94 = vmatpush.bf16.msra.mxu0 %v75
  %95 = vmatpush.bf16.msra.mxu0 %v74
  %96 = vmatpush.bf16.msra.mxu0 %v73
  %97 = vmatmul.bf16.gmra.mxu0 %v39
  %v98 = vpop.f32.mrf.mxu0
  %v99 = vadd.f32 0.0, %v98
  %v100 = vpop.f32.mrf.mxu0
  %v101 = vadd.f32 0.0, %v100
  %102 = vdwg.mxu0
  %v103 = vld [vmem:[%s2] sm:$0xff]
  %v104 = vld [vmem:[%s2 + $0x8] sm:$0xff]
  %106 = vset.pattern.permute.xlu0 0
  %107 = vperm.xlu0 %106, %v103
  %v108 = vpop.permute.xlu0 %107
  %111 = vset.pattern.permute.xlu0 0
  %112 = vperm.xlu0 %111, %v104
  %v113 = vpop.permute.xlu0 %112
  %v115 = vmul.f32 %v99, %v108
  %v116 = vmul.f32 %v101, %v113
  %v117 = vld [vmem:[%s3] sm:$0x1]
  %v119 = vperm.slane %v117, 0
  %v121 = vmul.f32 %v115, %v119
  %v122 = vmul.f32 %v116, %v119
  %123 = vst [vmem:[%s4] sm:$0xff] %v121
  %124 = vst [vmem:[%s4 + $0x8] sm:$0xff] %v122
  // Predicated region
  $region18: #{normed_linear.1} parent=0 // pred_check
    _
  $region19: #{normed_linear.1} parent=0 // pred_check_branch
    %126 = sbr.rel (0) target = $region21
  $region20: #{normed_linear.1} parent=0 // pred_region
    _
  $region21: #{normed_linear.1} parent=0 // pred_fallthru
    _
  // Predicated region
  $region22: #{normed_linear.1} parent=0 // pred_check
    _
  $region23: #{normed_linear.1} parent=0 // pred_check_branch
    %128 = sbr.rel (0) target = $region25
  $region24: #{normed_linear.1} parent=0 // pred_region
    _
  $region25: #{normed_linear.1} parent=0 // pred_fallthru
    _

</llo_original>
